<compile_context>
chip_gen: v7x
topology: tpu7x:2x2x1
jax: 0.10.0
libtpu: 0.0.40
codegen_flags: <defaults>
</compile_context>

<pallas_src>
import functools

import jax
import jax.numpy as jnp
from jax import lax
from jax.experimental import pallas as pl
from jax.experimental.pallas import tpu as pltpu


def _round_up(x, m):
    return ((x + m - 1) // m) * m


def _pick_tile(total, granule, cap):
    """Largest multiple of `granule` that divides `total` and is <= cap.

    `total` must be a multiple of `granule`.  If total <= cap the whole axis
    is a single tile (no extra padding ever introduced by tiling).
    """
    if total <= cap:
        return total
    best = granule
    d = granule
    while d <= cap:
        if total % d == 0:
            best = d
        d += granule
    return best


def _context_pooler_kernel(x_ref, w_ref, b_ref, o_ref):
    # x_ref: (tb, Kp)  first-token activations (resident across N panels)
    # w_ref: (tn, Kp)  dense weight panel, native torch [out, in] layout
    # b_ref: (1,  tn)  bias panel
    # o_ref: (tb, tn)  output tile
    acc = lax.dot_general(
        x_ref[...],
        w_ref[...],
        dimension_numbers=(((1,), (1,)), ((), ())),  # x @ W.T on the MXU
        preferred_element_type=jnp.float32,
    )
    pooled = acc + b_ref[...].astype(jnp.float32)
    o_ref[...] = jnp.maximum(pooled, 0.0).astype(o_ref.dtype)


@functools.partial(jax.jit, static_argnames=("tb_max", "tn_max"))
def context_pooler(hidden_states, weight, bias, *, tb_max=512, tn_max=512):
    """relu(hidden_states[:, 0] @ weight.T + bias).

    hidden_states: [B, S, H]; weight: [H, H] in torch Linear layout
    ([out, in]); bias: [H].  Returns [B, H] in hidden_states.dtype.
    """
    B, S, H = hidden_states.shape
    assert weight.shape == (H, H) and bias.shape == (H,)
    out_dtype = hidden_states.dtype
    itemsize = jnp.dtype(out_dtype).itemsize

    # Only the first token ever reaches the kernel.
    x0 = hidden_states[:, 0, :]  # [B, H]

    # Pad only to hardware granules (sublane 8, lane 128).
    Bp = _round_up(B, 8)
    Hp = _round_up(H, 128)  # padded K (=in) and N (=out); dense layer is square

    # Tiles are divisors of the padded sizes -> no additional padding traffic.
    tb = _pick_tile(Bp, 8, tb_max)
    tn = _pick_tile(Hp, 128, tn_max)

    # Zero padding: padded K columns contribute 0 to the contraction; padded
    # B rows / N columns are sliced off below.
    x0p = jnp.pad(x0, ((0, Bp - B), (0, Hp - H)))
    wp = jnp.pad(weight, ((0, Hp - H), (0, Hp - H)))  # native [out, in] layout
    bp = jnp.pad(bias, ((0, Hp - H),)).reshape(1, Hp)

    grid = (Bp // tb, Hp // tn)

    cost = pl.CostEstimate(
        flops=2 * B * H * H,
        transcendentals=0,
        bytes_accessed=(H * H + 2 * B * H) * itemsize,
    )

    out = pl.pallas_call(
        _context_pooler_kernel,
        out_shape=jax.ShapeDtypeStruct((Bp, Hp), out_dtype),
        grid_spec=pltpu.PrefetchScalarGridSpec(
            num_scalar_prefetch=0,
            grid=grid,
            in_specs=[
                # x0: resident across the N-panel axis (block idx ignores j).
                pl.BlockSpec((tb, Hp), lambda i, j: (i, 0)),
                # weight: one N-panel of the full contraction, [out, in].
                pl.BlockSpec((tn, Hp), lambda i, j: (j, 0)),
                # bias panel.
                pl.BlockSpec((1, tn), lambda i, j: (0, j)),
            ],
            out_specs=pl.BlockSpec((tb, tn), lambda i, j: (i, j)),
        ),
        compiler_params=pltpu.CompilerParams(
            dimension_semantics=("parallel", "parallel"),
        ),
        cost_estimate=cost,
    )(x0p, wp, bp)

    return out[:B, :H]


def _reference(hidden_states, weight, bias):
    x0 = hidden_states[:, 0, :].astype(jnp.float32)
    w = weight.astype(jnp.float32)
    b = bias.astype(jnp.float32)
    return jnp.maximum(x0 @ w.T + b, 0.0).astype(hidden_states.dtype)


if __name__ == "__main__":
    B, S, H = 2, 8, 32
    key = jax.random.PRNGKey(0)
    k1, k2, k3 = jax.random.split(key, 3)

    hidden_states = jax.random.normal(k1, (B, S, H), dtype=jnp.float32)
    weight = jax.random.normal(k2, (H, H), dtype=jnp.float32) * 0.1
    bias = jax.random.normal(k3, (H,), dtype=jnp.float32) * 0.1

    out = context_pooler(hidden_states, weight, bias)
    out = jax.block_until_ready(out)

    ref = _reference(hidden_states, weight, bias)
    assert out.shape == (B, H)
    assert jnp.allclose(out, ref, atol=2e-3, rtol=2e-3), "mismatch vs reference"

    print("KERNEL_OK")
</pallas_src>

<mosaic_0001>
module attributes {stable_mosaic.version = 11 : i64} {
  func.func @_context_pooler_kernel(%arg0: i32, %arg1: i32, %arg2: memref<8x128xf32, #tpu.memory_space<vmem>>, %arg3: memref<128x128xf32, #tpu.memory_space<vmem>>, %arg4: memref<1x128xf32, #tpu.memory_space<vmem>>, %arg5: memref<8x128xf32, #tpu.memory_space<vmem>>) attributes {dimension_semantics = [#tpu.dimension_semantics<parallel>, #tpu.dimension_semantics<parallel>], iteration_bounds = array<i64: 1, 1>, scalar_prefetch = 0 : i64, scratch_operands = 0 : i64, tpu.core_type = #tpu.core_type<tc>, window_params = [{transform_indices = @transform_0, window_bounds = array<i64: 8, 128>}, {transform_indices = @transform_1, window_bounds = array<i64: 128, 128>}, {transform_indices = @transform_2, window_bounds = array<i64: 1, 128>}, {transform_indices = @transform_3, window_bounds = array<i64: 8, 128>}]} {
    %c0 = arith.constant 0 : index
    %c0_0 = arith.constant 0 : index
    %0 = vector.load %arg2[%c0, %c0_0] : memref<8x128xf32, #tpu.memory_space<vmem>>, vector<8x128xf32>
    %c0_1 = arith.constant 0 : index
    %c0_2 = arith.constant 0 : index
    %1 = vector.load %arg3[%c0_1, %c0_2] : memref<128x128xf32, #tpu.memory_space<vmem>>, vector<128x128xf32>
    %cst = arith.constant dense<0.000000e+00> : vector<8x128xf32>
    %2 = tpu.matmul %0, %1, %cst {dimension_numbers = #tpu.dot_dimension_numbers<[1], [1], [0], [0], [0, 0, 1, 0], [], []>} : vector<8x128xf32>, vector<128x128xf32>, vector<8x128xf32> -> vector<8x128xf32>
    %c0_3 = arith.constant 0 : index
    %c0_4 = arith.constant 0 : index
    %3 = vector.load %arg4[%c0_3, %c0_4] : memref<1x128xf32, #tpu.memory_space<vmem>>, vector<1x128xf32>
    %4 = vector.broadcast %3 : vector<1x128xf32> to vector<8x128xf32>
    %5 = arith.addf %2, %4 : vector<8x128xf32>
    %cst_5 = arith.constant 0.000000e+00 : f32
    %6 = vector.broadcast %cst_5 : f32 to vector<8x128xf32>
    %7 = arith.maximumf %5, %6 : vector<8x128xf32>
    %c0_6 = arith.constant 0 : index
    %c0_7 = arith.constant 0 : index
    %8 = vector.load %arg5[%c0_6, %c0_7] : memref<8x128xf32, #tpu.memory_space<vmem>>, vector<8x128xf32>
    tpu.vector_store %arg5[%c0_6, %c0_7], %7 {strides = array<i32>} : memref<8x128xf32, #tpu.memory_space<vmem>>, vector<8x128xf32>,
    return
  }
  func.func @transform_0(%arg0: i32, %arg1: i32) -> (i32, i32) {
    %c0_i32 = arith.constant 0 : i32
    %c0_i32_0 = arith.constant 0 : i32
    return %arg0, %c0_i32 : i32, i32
  }
  func.func @transform_1(%arg0: i32, %arg1: i32) -> (i32, i32) {
    %c0_i32 = arith.constant 0 : i32
    %c0_i32_0 = arith.constant 0 : i32
    return %arg1, %c0_i32 : i32, i32
  }
  func.func @transform_2(%arg0: i32, %arg1: i32) -> (i32, i32) {
    %c0_i32 = arith.constant 0 : i32
    %c0_i32_0 = arith.constant 0 : i32
    return %c0_i32, %arg1 : i32, i32
  }
  func.func @transform_3(%arg0: i32, %arg1: i32) -> (i32, i32) {
    %c0_i32 = arith.constant 0 : i32
    return %arg0, %arg1 : i32, i32
  }
}

</mosaic_0001>

<llo_original>
// kernel: context_pooler.1
$region0: #{context_pooler.1}
  #allocation0 [shape = 'u32[]', space=smem, size = 0x4, offset = 0x4, fixed_abs, tag = 'smem constant byte address 0x4 - core index']
  #allocation1 [shape = 'u32[144,128]{1,0:T(1,128)}', space=vmem, size = 0x12000, scoped, tag = 'internal scratch']
  %s0 = inlined_call_operand.vmem [shape: f32[8,128], index: 0, kind: input, shape index: {}]
  %s1 = inlined_call_operand.vmem [shape: f32[128,128], index: 1, kind: input, shape index: {}]
  %s2 = inlined_call_operand.vmem [shape: f32[1,128], index: 2, kind: input, shape index: {}]
  %s3 = inlined_call_operand.vmem [shape: f32[8,128], index: 3, kind: output, shape index: {}]
  %s4 = sld [smem:[#allocation0]]
  $region22: #{context_pooler.1} parent=0
    _
  %s6 = ssub.s32 1, %s4
  %s7 = scalar_select 0, %s6, %s4
  // Predicated region
  $region2: #{context_pooler.1} parent=0 // pred_check
    _
  $region3: #{context_pooler.1} parent=0 // pred_check_branch
    %9 = sbr.rel (0) target = $region5
  $region4: #{context_pooler.1} parent=0 // pred_region
    _
  $region5: #{context_pooler.1} parent=0 // pred_fallthru
    _
  // Predicated region
  $region6: #{context_pooler.1} parent=0 // pred_check
    _
  $region7: #{context_pooler.1} parent=0 // pred_check_branch
    %11 = sbr.rel (0) target = $region9
  $region8: #{context_pooler.1} parent=0 // pred_region
    _
  $region9: #{context_pooler.1} parent=0 // pred_fallthru
    _
  // Predicated region
  $region10: #{context_pooler.1} parent=0 // pred_check
    _
  $region11: #{context_pooler.1} parent=0 // pred_check_branch
    %13 = sbr.rel (0) target = $region13
  $region12: #{context_pooler.1} parent=0 // pred_region
    _
  $region13: #{context_pooler.1} parent=0 // pred_fallthru
    _
  %v14 = vld [vmem:[%s0] sm:$0xff]
  %v15 = vld [vmem:[%s1] sm:$0xff]
  %v16 = vld [vmem:[%s1 + $0x8] sm:$0xff]
  %v17 = vld [vmem:[%s1 + $0x10] sm:$0xff]
  %v18 = vld [vmem:[%s1 + $0x18] sm:$0xff]
  %v19 = vld [vmem:[%s1 + $0x20] sm:$0xff]
  %v20 = vld [vmem:[%s1 + $0x28] sm:$0xff]
  %v21 = vld [vmem:[%s1 + $0x30] sm:$0xff]
  %v22 = vld [vmem:[%s1 + $0x38] sm:$0xff]
  %v23 = vld [vmem:[%s1 + $0x40] sm:$0xff]
  %v24 = vld [vmem:[%s1 + $0x48] sm:$0xff]
  %v25 = vld [vmem:[%s1 + $0x50] sm:$0xff]
  %v26 = vld [vmem:[%s1 + $0x58] sm:$0xff]
  %v27 = vld [vmem:[%s1 + $0x60] sm:$0xff]
  %v28 = vld [vmem:[%s1 + $0x68] sm:$0xff]
  %v29 = vld [vmem:[%s1 + $0x70] sm:$0xff]
  %v30 = vld [vmem:[%s1 + $0x78] sm:$0xff]
  %v31 = vld [vmem:[%s2] sm:$0x1]
  %v33 = vlaneseq
  %v34 = vshrl.u32 %v33, 7
  %v35 = vsub.s32 0, %v34
  %v36 = vrot.slane %v31, %v35
  %38 = vmatprep.subr.mxu0 0.0
  %39 = vmatpush1.xpose.msra.mxu0 %v15
  %40 = vmatprep.subr.mxu0 0.0
  %41 = vmatpush1.xpose.msra.mxu0 %v16
  %42 = vmatprep.subr.mxu0 0.0
  %43 = vmatpush1.xpose.msra.mxu0 %v17
  %44 = vmatprep.subr.mxu0 0.0
  %45 = vmatpush1.xpose.msra.mxu0 %v18
  %46 = vmatprep.subr.mxu0 0.0
  %47 = vmatpush1.xpose.msra.mxu0 %v19
  %48 = vmatprep.subr.mxu0 0.0
  %49 = vmatpush1.xpose.msra.mxu0 %v20
  %50 = vmatprep.subr.mxu0 0.0
  %51 = vmatpush1.xpose.msra.mxu0 %v21
  %52 = vmatprep.subr.mxu0 0.0
  %53 = vmatpush1.xpose.msra.mxu0 %v22
  %54 = vmatprep.subr.mxu0 0.0
  %55 = vmatpush1.xpose.msra.mxu0 %v23
  %56 = vmatprep.subr.mxu0 0.0
  %57 = vmatpush1.xpose.msra.mxu0 %v24
  %58 = vmatprep.subr.mxu0 0.0
  %59 = vmatpush1.xpose.msra.mxu0 %v25
  %60 = vmatprep.subr.mxu0 0.0
  %61 = vmatpush1.xpose.msra.mxu0 %v26
  %62 = vmatprep.subr.mxu0 0.0
  %63 = vmatpush1.xpose.msra.mxu0 %v27
  %64 = vmatprep.subr.mxu0 0.0
  %65 = vmatpush1.xpose.msra.mxu0 %v28
  %66 = vmatprep.subr.mxu0 0.0
  %67 = vmatpush1.xpose.msra.mxu0 %v29
  %68 = vmatprep.subr.mxu0 0.0
  %69 = vmatpush1.xpose.msra.mxu0 %v30
  %70 = vmatprep.subr.mxu0 0.0
  %71 = vmatpush1.xpose.msra.mxu0 0.0
  %72 = vmatprep.subr.mxu0 0.0
  %73 = vmatpush1.xpose.msra.mxu0 0.0
  %74 = vmatprep.subr.mxu0 0.0
  %75 = vmatpush1.xpose.msra.mxu0 0.0
  %76 = vmatprep.subr.mxu0 0.0
  %77 = vmatpush1.xpose.msra.mxu0 0.0
  %78 = vmatprep.subr.mxu0 0.0
  %79 = vmatpush1.xpose.msra.mxu0 0.0
  %80 = vmatprep.subr.mxu0 0.0
  %81 = vmatpush1.xpose.msra.mxu0 0.0
  %82 = vmatprep.subr.mxu0 0.0
  %83 = vmatpush1.xpose.msra.mxu0 0.0
  %84 = vmatprep.subr.mxu0 0.0
  %85 = vmatpush1.xpose.msra.mxu0 0.0
  %86 = vmatprep.subr.mxu0 0.0
  %87 = vmatpush1.xpose.msra.mxu0 0.0
  %88 = vmatprep.subr.mxu0 0.0
  %89 = vmatpush1.xpose.msra.mxu0 0.0
  %90 = vmatprep.subr.mxu0 0.0
  %91 = vmatpush1.xpose.msra.mxu0 0.0
  %92 = vmatprep.subr.mxu0 0.0
  %93 = vmatpush1.xpose.msra.mxu0 0.0
  %94 = vmatprep.subr.mxu0 0.0
  %95 = vmatpush1.xpose.msra.mxu0 0.0
  %96 = vmatprep.subr.mxu0 0.0
  %97 = vmatpush1.xpose.msra.mxu0 0.0
  %98 = vmatprep.subr.mxu0 0.0
  %99 = vmatpush1.xpose.msra.mxu0 0.0
  %100 = vmatprep.subr.mxu0 0.0
  %101 = vmatpush1.xpose.msra.mxu0 0.0
  %102 = vmatprep.mubr.f32.mxu0 0.0
  %103 = vmatmul.mubr.f32.gmra.mrb[0].mxu0 %v14
  %v104 = vpop.f32.mrb[0].mxu0
  %v105 = vadd.f32 %v36, %v104
  %v106 = vpop.f32.mrb[0].mxu0
  %107 = vdwg.mxu0
  %v108 = vmax.f32 %v105, 0.0
  %109 = vst [vmem:[%s3] sm:$0xff] %v108
  // Predicated region
  $region14: #{context_pooler.1} parent=0 // pred_check
    _
  $region15: #{context_pooler.1} parent=0 // pred_check_branch
    %111 = sbr.rel (0) target = $region17
  $region16: #{context_pooler.1} parent=0 // pred_region
    _
  $region17: #{context_pooler.1} parent=0 // pred_fallthru
    _
  // Predicated region
  $region18: #{context_pooler.1} parent=0 // pred_check
    _
  $region19: #{context_pooler.1} parent=0 // pred_check_branch
    %113 = sbr.rel (0) target = $region21
  $region20: #{context_pooler.1} parent=0 // pred_region
    _
  $region21: #{context_pooler.1} parent=0 // pred_fallthru
    _

</llo_original>
